<compile_context>
chip_gen: v5e
topology: v5e:2x2
jax: 0.10.0
libtpu: 0.0.40
codegen_flags: <defaults>
</compile_context>

<pallas_src>
import jax
import jax.numpy as jnp
from jax import lax
from jax.experimental import pallas as pl
from jax.experimental.pallas import tpu as pltpu


def _round_up(x, m):
    return ((x + m - 1) // m) * m


def _fh_kernel_multi_k(x_ref, w_ref, b_ref, o_ref, acc_ref):
    # x_ref: [tm, tk]   w_ref: [tn, tk]   b_ref: [1, tn]
    # o_ref: [tm, tn]   acc_ref (VMEM scratch, f32): [tm, tn]
    k = pl.program_id(2)

    @pl.when(k == 0)
    def _():
        acc_ref[...] = jnp.zeros_like(acc_ref)

    # x @ W^T without materializing a transposed weight copy in HBM:
    # contract dim 1 of x with dim 1 of W (PyTorch [tw, nf] layout), f32 accumulate.
    acc_ref[...] += lax.dot_general(
        x_ref[...], w_ref[...],
        dimension_numbers=(((1,), (1,)), ((), ())),
        preferred_element_type=jnp.float32)

    @pl.when(k == pl.num_programs(2) - 1)
    def _():
        o_ref[...] = (acc_ref[...] + b_ref[...]).astype(o_ref.dtype)


def _fh_kernel_single_k(x_ref, w_ref, b_ref, o_ref):
    # Whole contraction in one step: no accumulator scratch needed.
    acc = lax.dot_general(
        x_ref[...], w_ref[...],
        dimension_numbers=(((1,), (1,)), ((), ())),
        preferred_element_type=jnp.float32)
    o_ref[...] = (acc + b_ref[...]).astype(o_ref.dtype)


def flatten_head_forward(x, weight, bias, *, compute_dtype=None,
                         block_m=256, block_n=512, block_k=512):
    """Flatten_Head forward: Flatten(-2) -> Linear(nf, target_window) -> Dropout(0).

    x:      [B, n_vars, d_model, patch_num]
    weight: [target_window, nf]   (PyTorch nn.Linear layout, NOT pre-transposed)
    bias:   [target_window]
    Returns [B, n_vars, target_window] in x.dtype.
    """
    B, n_vars, d_model, patch_num = x.shape
    nf = d_model * patch_num
    tw = weight.shape[0]
    assert weight.shape == (tw, nf)

    out_dtype = x.dtype
    M = B * n_vars
    x2d = x.reshape(M, nf)                      # Flatten(start_dim=-2)

    # Optional narrow compute dtype (halves HBM bytes; f32 accumulation kept).
    if compute_dtype is not None:
        x2d = x2d.astype(compute_dtype)
        weight = weight.astype(compute_dtype)
    bias_f32 = bias.astype(jnp.float32)

    in_itemsize = jnp.dtype(x2d.dtype).itemsize
    out_itemsize = jnp.dtype(out_dtype).itemsize

    # ---- tile selection ---------------------------------------------------
    # Lane-dense padding targets: last dims to multiples of 128; rows to a
    # sublane multiple for the packed dtype (8 for f32, 16 for bf16).
    sublane = 8 * max(1, 4 // in_itemsize)
    nf_p = _round_up(nf, 128)
    tw_p = _round_up(tw, 128)
    m_sub = _round_up(M, sublane)

    tm = min(_round_up(block_m, sublane), m_sub)
    m_p = _round_up(m_sub, tm)                  # M padded to a tile multiple

    tk = 128
    for cand in (block_k, 512, 384, 256, 128):
        if cand <= nf_p and nf_p % cand == 0:
            tk = cand
            break

    tn = tw_p
    for cand in (block_n, 512, 384, 256, 128):
        if cand <= tw_p and tw_p % cand == 0:
            tn = cand
            break

    grid_m = m_p // tm
    grid_n = tw_p // tn
    grid_k = nf_p // tk

    # ---- zero-padding (only when actually needed) ---------------------------
    if (m_p, nf_p) != (M, nf):
        x2d = jnp.pad(x2d, ((0, m_p - M), (0, nf_p - nf)))
    if (tw_p, nf_p) != (tw, nf):
        weight = jnp.pad(weight, ((0, tw_p - tw), (0, nf_p - nf)))
    b2d = bias_f32.reshape(1, tw)
    if tw_p != tw:
        b2d = jnp.pad(b2d, ((0, 0), (0, tw_p - tw)))

    # ---- VMEM budget & cost hint --------------------------------------------
    vmem_est = (2 * tm * tk * in_itemsize            # x tile (double-buffered)
                + 2 * tn * tk * in_itemsize          # W tile (double-buffered)
                + 2 * tn * 4                         # bias tile
                + 2 * tm * tn * out_itemsize         # out tile
                + (tm * tn * 4 if grid_k > 1 else 0))  # f32 accumulator
    vmem_limit = int(min(max(2 * vmem_est, 16 * 1024 * 1024), 48 * 1024 * 1024))

    cost = pl.CostEstimate(
        flops=2 * m_p * nf_p * tw_p,
        transcendentals=0,
        bytes_accessed=(grid_n * m_p * nf_p * in_itemsize
                        + grid_m * tw_p * nf_p * in_itemsize
                        + m_p * tw_p * out_itemsize))

    # ---- pallas_call --------------------------------------------------------
    if grid_k == 1:
        grid = (grid_m, grid_n)
        in_specs = [
            pl.BlockSpec((tm, nf_p), lambda i, j: (i, 0)),   # x tile
            pl.BlockSpec((tn, nf_p), lambda i, j: (j, 0)),   # weight tile
            pl.BlockSpec((1, tn), lambda i, j: (0, j)),      # bias tile
        ]
        out_specs = pl.BlockSpec((tm, tn), lambda i, j: (i, j))
        scratch = []
        kernel = _fh_kernel_single_k
        dims = ("parallel", "parallel")
    else:
        grid = (grid_m, grid_n, grid_k)
        in_specs = [
            pl.BlockSpec((tm, tk), lambda i, j, k: (i, k)),  # x tile
            pl.BlockSpec((tn, tk), lambda i, j, k: (j, k)),  # weight tile
            pl.BlockSpec((1, tn), lambda i, j, k: (0, j)),   # bias tile
        ]
        out_specs = pl.BlockSpec((tm, tn), lambda i, j, k: (i, j))
        scratch = [pltpu.VMEM((tm, tn), jnp.float32)]
        kernel = _fh_kernel_multi_k
        dims = ("parallel", "parallel", "arbitrary")

    out2d = pl.pallas_call(
        kernel,
        out_shape=jax.ShapeDtypeStruct((m_p, tw_p), out_dtype),
        grid_spec=pltpu.PrefetchScalarGridSpec(
            num_scalar_prefetch=0,
            grid=grid,
            in_specs=in_specs,
            out_specs=out_specs,
            scratch_shapes=scratch,
        ),
        compiler_params=pltpu.CompilerParams(
            dimension_semantics=dims,
            vmem_limit_bytes=vmem_limit),
        cost_estimate=cost,
    )(x2d, weight, b2d)

    # Strip padding, restore [B, n_vars, target_window].
    return out2d[:M, :tw].reshape(B, n_vars, tw)


def flatten_head_reference(x, weight, bias):
    B, n_vars = x.shape[:2]
    nf = x.shape[2] * x.shape[3]
    x2d = x.reshape(B, n_vars, nf)
    out = jnp.einsum("bvn,tn->bvt", x2d, weight,
                     preferred_element_type=jnp.float32)
    return (out + bias).astype(x.dtype)


if __name__ == "__main__":
    # Small shapes consistent with the module.
    B, n_vars, d_model, patch_num = 2, 4, 8, 4
    nf = d_model * patch_num          # 32
    target_window = 16

    key = jax.random.PRNGKey(0)
    kx, kw, kb = jax.random.split(key, 3)

    x = jax.random.normal(kx, (B, n_vars, d_model, patch_num), dtype=jnp.float32)
    # PyTorch Linear default init: U(-1/sqrt(nf), 1/sqrt(nf))
    bound = 1.0 / (nf ** 0.5)
    weight = jax.random.uniform(kw, (target_window, nf), jnp.float32, -bound, bound)
    bias = jax.random.uniform(kb, (target_window,), jnp.float32, -bound, bound)

    ref = flatten_head_reference(x, weight, bias)

    # Full-precision path: matches the PyTorch module numerics.
    out = jax.block_until_ready(flatten_head_forward(x, weight, bias))
    assert out.shape == (B, n_vars, target_window)
    assert jnp.allclose(out, ref, atol=1e-5, rtol=1e-5), "f32 mismatch vs reference"

    # bf16-operand path (memory-bandwidth optimization; f32 accumulation in-kernel).
    out_bf16 = jax.block_until_ready(
        flatten_head_forward(x, weight, bias, compute_dtype=jnp.bfloat16))
    assert out_bf16.shape == (B, n_vars, target_window)
    assert jnp.allclose(out_bf16, ref, atol=5e-2, rtol=5e-2), "bf16 mismatch vs reference"

    # Exercise the multi-K accumulator path with a larger contraction dim.
    B2, nv2, dm2, pn2 = 2, 4, 64, 8          # nf = 512 -> grid_k > 1 with block_k=256
    tw2 = 192
    kx2, kw2, kb2 = jax.random.split(jax.random.PRNGKey(1), 3)
    x2 = jax.random.normal(kx2, (B2, nv2, dm2, pn2), dtype=jnp.float32)
    w2 = jax.random.uniform(kw2, (tw2, dm2 * pn2), jnp.float32, -0.05, 0.05)
    b2 = jax.random.uniform(kb2, (tw2,), jnp.float32, -0.05, 0.05)
    out2 = jax.block_until_ready(
        flatten_head_forward(x2, w2, b2, block_k=256))
    ref2 = flatten_head_reference(x2, w2, b2)
    assert out2.shape == (B2, nv2, tw2)
    assert jnp.allclose(out2, ref2, atol=1e-4, rtol=1e-4), "multi-K mismatch vs reference"

    # TODO(synk): Dropout is identity for p=0 / eval mode, so it is omitted.
    print("KERNEL_OK")
</pallas_src>

<mosaic_0001>
module attributes {stable_mosaic.version = 11 : i64} {
  func.func @_fh_kernel_single_k(%arg0: i32, %arg1: i32, %arg2: memref<8x128xf32, #tpu.memory_space<vmem>>, %arg3: memref<128x128xf32, #tpu.memory_space<vmem>>, %arg4: memref<1x128xf32, #tpu.memory_space<vmem>>, %arg5: memref<8x128xf32, #tpu.memory_space<vmem>>) attributes {dimension_semantics = [#tpu.dimension_semantics<parallel>, #tpu.dimension_semantics<parallel>], iteration_bounds = array<i64: 1, 1>, scalar_prefetch = 0 : i64, scratch_operands = 0 : i64, tpu.core_type = #tpu.core_type<tc>, window_params = [{transform_indices = @transform_0, window_bounds = array<i64: 8, 128>}, {transform_indices = @transform_1, window_bounds = array<i64: 128, 128>}, {transform_indices = @transform_2, window_bounds = array<i64: 1, 128>}, {transform_indices = @transform_3, window_bounds = array<i64: 8, 128>}]} {
    %c0 = arith.constant 0 : index
    %c0_0 = arith.constant 0 : index
    %0 = vector.load %arg2[%c0, %c0_0] : memref<8x128xf32, #tpu.memory_space<vmem>>, vector<8x128xf32>
    %c0_1 = arith.constant 0 : index
    %c0_2 = arith.constant 0 : index
    %1 = vector.load %arg3[%c0_1, %c0_2] : memref<128x128xf32, #tpu.memory_space<vmem>>, vector<128x128xf32>
    %cst = arith.constant dense<0.000000e+00> : vector<8x128xf32>
    %2 = tpu.matmul %0, %1, %cst {dimension_numbers = #tpu.dot_dimension_numbers<[1], [1], [0], [0], [0, 0, 1, 0], [], []>} : vector<8x128xf32>, vector<128x128xf32>, vector<8x128xf32> -> vector<8x128xf32>
    %c0_3 = arith.constant 0 : index
    %c0_4 = arith.constant 0 : index
    %3 = vector.load %arg4[%c0_3, %c0_4] : memref<1x128xf32, #tpu.memory_space<vmem>>, vector<1x128xf32>
    %4 = vector.broadcast %3 : vector<1x128xf32> to vector<8x128xf32>
    %5 = arith.addf %2, %4 : vector<8x128xf32>
    %c0_5 = arith.constant 0 : index
    %c0_6 = arith.constant 0 : index
    %6 = vector.load %arg5[%c0_5, %c0_6] : memref<8x128xf32, #tpu.memory_space<vmem>>, vector<8x128xf32>
    tpu.vector_store %arg5[%c0_5, %c0_6], %5 {strides = array<i32>} : memref<8x128xf32, #tpu.memory_space<vmem>>, vector<8x128xf32>,
    return
  }
  func.func @transform_0(%arg0: i32, %arg1: i32) -> (i32, i32) {
    %c0_i32 = arith.constant 0 : i32
    %c0_i32_0 = arith.constant 0 : i32
    return %arg0, %c0_i32 : i32, i32
  }
  func.func @transform_1(%arg0: i32, %arg1: i32) -> (i32, i32) {
    %c0_i32 = arith.constant 0 : i32
    %c0_i32_0 = arith.constant 0 : i32
    return %arg1, %c0_i32 : i32, i32
  }
  func.func @transform_2(%arg0: i32, %arg1: i32) -> (i32, i32) {
    %c0_i32 = arith.constant 0 : i32
    %c0_i32_0 = arith.constant 0 : i32
    return %c0_i32, %arg1 : i32, i32
  }
  func.func @transform_3(%arg0: i32, %arg1: i32) -> (i32, i32) {
    %c0_i32 = arith.constant 0 : i32
    return %arg0, %arg1 : i32, i32
  }
}

</mosaic_0001>

<llo_original>
// kernel: tpu_custom_call.1
$region0: #{tpu_custom_call.1}
  #allocation0 [shape = 'u32[]', space=smem, size = 0x4, offset = 0x4, fixed_abs, tag = 'smem constant byte address 0x4 - core index']
  #allocation1 [shape = 'u32[72,128]{1,0:T(1,128)}', space=vmem, size = 0x9000, scoped, tag = 'internal scratch']
  %s0 = inlined_call_operand.hbm [shape: f32[8,128], index: 0, kind: input, shape index: {}]
  %s1 = inlined_call_operand.hbm [shape: f32[128,128], index: 1, kind: input, shape index: {}]
  %s2 = inlined_call_operand.vmem [shape: f32[1,128], index: 2, kind: input, shape index: {}]
  %s3 = inlined_call_operand.hbm [shape: f32[8,128], index: 3, kind: output, shape index: {}]
  %s4 = sld [smem:[#allocation0]]
  $region30: #{tpu_custom_call.1} parent=0
    _
  %s6 = ssub.s32 1, %s4
  %s7 = scalar_select 0, %s6, %s4
  $region1: #{tpu_custom_call.1} parent=0
    #allocation2 [shape = 'u8[4096]{0}', space=vmem, size = 0x1000, scoped, tag = 'input window, operand 0, single buffered']
    #allocation3 [shape = 's32[1]{0}', space=sflag, size = 0x4, scoped, tag = 'scoped memory for tpu_custom_call.1']
    #allocation4 [shape = 's32[1]{0}', space=sflag, size = 0x4, scoped, tag = 'scoped memory for tpu_custom_call.1']
    #allocation5 [shape = 'u8[65536]{0}', space=vmem, size = 0x10000, scoped, tag = 'input window, operand 1, single buffered']
    #allocation6 [shape = 's32[1]{0}', space=sflag, size = 0x4, scoped, tag = 'scoped memory for tpu_custom_call.1']
    #allocation7 [shape = 'u8[4096]{0}', space=vmem, size = 0x1000, scoped, tag = 'output window, operand 0, single buffered']
    %8 = vsyncpa [#allocation3], 0
    %9 = vsyncpa [#allocation6], 0
    %10 = vsyncpa [#allocation4], 0
    // Predicated region
    $region2: #{tpu_custom_call.1} parent=1 // pred_check
      _
    $region3: #{tpu_custom_call.1} parent=1 // pred_check_branch
      %12 = sbr.rel (0) target = $region5
    $region4: #{tpu_custom_call.1} parent=1 // pred_region
      %14 = vsyncadd [#allocation3], 0
      %s16 = sshll.u32 %s0, 4
      %s17 = int_to_ptr.hbm [resolvable:$true] %s16
      %s18 = sshll.u32 [#allocation2], 4
      %s19 = int_to_ptr.vmem [resolvable:$true] %s18
      %21 = dma.hbm_to_vmem [thread:$0]  %s17, 128, %s19, [#allocation3]
    $region5: #{tpu_custom_call.1} parent=1 // pred_fallthru
      _
    // Predicated region
    $region6: #{tpu_custom_call.1} parent=1 // pred_check
      _
    $region7: #{tpu_custom_call.1} parent=1 // pred_check_branch
      %23 = sbr.rel (0) target = $region9
    $region8: #{tpu_custom_call.1} parent=1 // pred_region
      %25 = vsyncadd [#allocation6], 0
      %s26 = sshll.u32 %s1, 4
      %s27 = int_to_ptr.hbm [resolvable:$true] %s26
      %s28 = sshll.u32 [#allocation5], 4
      %s29 = int_to_ptr.vmem [resolvable:$true] %s28
      %34 = dma.hbm_to_vmem [thread:$0]  %s27, 2048, %s29, [#allocation6], 128, 128, 8
    $region9: #{tpu_custom_call.1} parent=1 // pred_fallthru
      _
    // Predicated region
    $region10: #{tpu_custom_call.1} parent=1 // pred_check
      _
    $region11: #{tpu_custom_call.1} parent=1 // pred_check_branch
      %36 = sbr.rel (0) target = $region13
    $region12: #{tpu_custom_call.1} parent=1 // pred_region
      _
    $region13: #{tpu_custom_call.1} parent=1 // pred_fallthru
      _
    // Predicated region
    $region14: #{tpu_custom_call.1} parent=1 // pred_check
      _
    $region15: #{tpu_custom_call.1} parent=1 // pred_check_branch
      %38 = sbr.rel (0) target = $region17
    $region16: #{tpu_custom_call.1} parent=1 // pred_region
      %40 = dma.done [#allocation3], 128
    $region17: #{tpu_custom_call.1} parent=1 // pred_fallthru
      _
    // Predicated region
    $region18: #{tpu_custom_call.1} parent=1 // pred_check
      _
    $region19: #{tpu_custom_call.1} parent=1 // pred_check_branch
      %42 = sbr.rel (0) target = $region21
    $region20: #{tpu_custom_call.1} parent=1 // pred_region
      %44 = dma.done [#allocation6], 2048
    $region21: #{tpu_custom_call.1} parent=1 // pred_fallthru
      _
    %v45 = vld [vmem:[#allocation2] sm:$0xff]
    %v46 = vld [vmem:[#allocation5] sm:$0xff]
    %v47 = vld [vmem:[#allocation5 + $0x8] sm:$0xff]
    %v48 = vld [vmem:[#allocation5 + $0x10] sm:$0xff]
    %v49 = vld [vmem:[#allocation5 + $0x18] sm:$0xff]
    %v50 = vld [vmem:[#allocation5 + $0x20] sm:$0xff]
    %v51 = vld [vmem:[#allocation5 + $0x28] sm:$0xff]
    %v52 = vld [vmem:[#allocation5 + $0x30] sm:$0xff]
    %v53 = vld [vmem:[#allocation5 + $0x38] sm:$0xff]
    %v54 = vld [vmem:[#allocation5 + $0x40] sm:$0xff]
    %v55 = vld [vmem:[#allocation5 + $0x48] sm:$0xff]
    %v56 = vld [vmem:[#allocation5 + $0x50] sm:$0xff]
    %v57 = vld [vmem:[#allocation5 + $0x58] sm:$0xff]
    %v58 = vld [vmem:[#allocation5 + $0x60] sm:$0xff]
    %v59 = vld [vmem:[#allocation5 + $0x68] sm:$0xff]
    %v60 = vld [vmem:[#allocation5 + $0x70] sm:$0xff]
    %v61 = vld [vmem:[#allocation5 + $0x78] sm:$0xff]
    %v62 = vld [vmem:[%s2] sm:$0x1]
    %v64 = vperm.slane %v62, 0
    %66 = vmatpush.xpose.msra.mxu0 %v61
    %67 = vmatpush.xpose.msra.mxu0 %v60
    %68 = vmatpush.xpose.msra.mxu0 %v59
    %69 = vmatpush.xpose.msra.mxu0 %v58
    %70 = vmatpush.xpose.msra.mxu0 %v57
    %71 = vmatpush.xpose.msra.mxu0 %v56
    %72 = vmatpush.xpose.msra.mxu0 %v55
    %73 = vmatpush.xpose.msra.mxu0 %v54
    %74 = vmatpush.xpose.msra.mxu0 %v53
    %75 = vmatpush.xpose.msra.mxu0 %v52
    %76 = vmatpush.xpose.msra.mxu0 %v51
    %77 = vmatpush.xpose.msra.mxu0 %v50
    %78 = vmatpush.xpose.msra.mxu0 %v49
    %79 = vmatpush.xpose.msra.mxu0 %v48
    %80 = vmatpush.xpose.msra.mxu0 %v47
    %81 = vmatpush.xpose.msra.mxu0 %v46
    %82 = vmatmul.f32.gmra.mxu0 %v45
    %v83 = vpop.f32.mrf.mxu0
    %v84 = vadd.f32 %v64, %v83
    %85 = vdwg.mxu0
    %86 = vst [vmem:[#allocation7] sm:$0xff] %v84
    // Predicated region
    $region22: #{tpu_custom_call.1} parent=1 // pred_check
      _
    $region23: #{tpu_custom_call.1} parent=1 // pred_check_branch
      %88 = sbr.rel (0) target = $region25
    $region24: #{tpu_custom_call.1} parent=1 // pred_region
      %90 = vsyncadd [#allocation4], 0
      %s92 = sshll.u32 [#allocation7], 4
      %s93 = int_to_ptr.vmem [resolvable:$true] %s92
      %s94 = sshll.u32 %s3, 4
      %s95 = int_to_ptr.hbm [resolvable:$true] %s94
      %97 = dma.vmem_to_hbm [thread:$0]  %s93, 128, %s95, [#allocation4]
    $region25: #{tpu_custom_call.1} parent=1 // pred_fallthru
      _
    // Predicated region
    $region26: #{tpu_custom_call.1} parent=1 // pred_check
      _
    $region27: #{tpu_custom_call.1} parent=1 // pred_check_branch
      %99 = sbr.rel (0) target = $region29
    $region28: #{tpu_custom_call.1} parent=1 // pred_region
      %101 = dma.done [#allocation4], 128
    $region29: #{tpu_custom_call.1} parent=1 // pred_fallthru
      _
    %102 = vsyncpa [#allocation3], 1
    %103 = vsyncpa [#allocation6], 1
    %104 = vsyncpa [#allocation4], 1

</llo_original>
